<compile_context>
chip_gen: v5e
topology: v5e:2x2
jax: 0.10.0
libtpu: 0.0.40
codegen_flags: <defaults>
</compile_context>

<pallas_src>
import jax
import jax.numpy as jnp
from jax.experimental import pallas as pl
from jax.experimental.pallas import tpu as pltpu

_LANES = 128
_BLOCK_CAP_BYTES = 2 * 1024 * 1024  # per-block cap; 2 in + 2 out buffers = 8 MiB worst case


def _cfg_kernel(sscale_ref, w_ref, ceff_ref, x_ref, o_ref):
    # sscale_ref: (B,)   SMEM, 1/(1+sigma^2) per batch element.
    # w_ref:      (C*C,) SMEM, row-major inner-model channel-mix weights.
    # ceff_ref:   (C,)   SMEM, folded bias (= b + c_uncond + (c_cond-c_uncond)*scale).
    # x_ref/o_ref: (BT, C, TR, 128) — per-channel slabs are dense (TR, 128) tiles.
    BT = x_ref.shape[0]
    C = x_ref.shape[1]
    b0 = pl.program_id(0) * BT
    for lb in range(BT):
        s = sscale_ref[b0 + lb]  # scalar sigma-dependent inner-model scale
        for c in range(C):
            # Fold s into the scalars (sreg math), start the accumulator at the
            # broadcast bias, then unrolled broadcast-scalar FMAs on the VPU.
            acc = (x_ref[lb, 0].astype(jnp.float32) * (w_ref[0 * C + c] * s)
                   + ceff_ref[c] * s)
            for k in range(1, C):
                acc = acc + x_ref[lb, k].astype(jnp.float32) * (w_ref[k * C + c] * s)
            # Folded calc_cond_uncond_batch accumulation + CFG combine.
            o_ref[lb, c] = acc.astype(o_ref.dtype)


def cfg_noise_predictor(x, sigma, w, b, c_cond, c_uncond, cond_scale):
    """x: NCHW, sigma: (B,), w: (C,C), b/c_cond/c_uncond: (C,), cond_scale: python float."""
    B, C, H, W = x.shape
    HW = H * W
    itemsize = x.dtype.itemsize

    x_flat = x.reshape(B, C, HW)  # free reshape, no transpose

    # Pad spatial to a multiple of 128 lanes -> lane-dense, unmasked stores.
    HW_p = ((HW + _LANES - 1) // _LANES) * _LANES
    if HW_p != HW:
        x_flat = jnp.pad(x_flat, ((0, 0), (0, 0), (0, HW_p - HW)))
    R = HW_p // _LANES

    # Row (sublane) tile: biggest that keeps the block under the cap.
    row_bytes = C * _LANES * itemsize
    max_rows = max(1, _BLOCK_CAP_BYTES // row_bytes)
    if R <= max_rows:
        tr = R  # full extent (allowed even if not a multiple of 8)
    else:
        # Pad rows to a multiple of 8 so tiles are (8k, 128)-aligned.
        R_p = ((R + 7) // 8) * 8
        if R_p != R:
            x_flat = jnp.pad(x_flat, ((0, 0), (0, 0), (0, (R_p - R) * _LANES)))
            R = R_p
        tr = 8
        t = 8
        while t <= max_rows:
            if R % t == 0:
                tr = t
            t += 8

    x_4d = x_flat.reshape(B, C, R, _LANES)

    # Batch tile: fold whole batches into one block when the tensor is small,
    # keeping the grid as coarse as possible (per-step overhead ~0.35 us).
    bb = 1
    d = 1
    while d <= B:
        if B % d == 0 and d * tr * row_bytes <= _BLOCK_CAP_BYTES:
            bb = d
        d += 1

    grid = (B // bb, R // tr)

    # Host-side scalar folding (all tiny; live in SMEM).
    sscale = 1.0 / (1.0 + sigma.astype(jnp.float32) ** 2)                 # (B,)
    c_eff = (b.astype(jnp.float32)
             + c_uncond.astype(jnp.float32)
             + (c_cond.astype(jnp.float32) - c_uncond.astype(jnp.float32))
             * jnp.float32(cond_scale))                                   # (C,)
    w_flat = w.astype(jnp.float32).reshape(C * C)                         # (C*C,)

    cost = pl.CostEstimate(
        flops=2 * B * C * C * HW_p,
        transcendentals=0,
        bytes_accessed=2 * B * C * HW_p * itemsize,
    )

    out_4d = pl.pallas_call(
        _cfg_kernel,
        out_shape=jax.ShapeDtypeStruct((B, C, R, _LANES), x.dtype),
        grid_spec=pltpu.PrefetchScalarGridSpec(
            num_scalar_prefetch=0,
            grid=grid,
            in_specs=[
                pl.BlockSpec(memory_space=pltpu.MemorySpace.SMEM),   # sigma scale (B,)
                pl.BlockSpec(memory_space=pltpu.MemorySpace.SMEM),   # w flat (C*C,)
                pl.BlockSpec(memory_space=pltpu.MemorySpace.SMEM),   # c_eff (C,)
                pl.BlockSpec((bb, C, tr, _LANES), lambda bi, ti: (bi, 0, ti, 0)),
            ],
            out_specs=pl.BlockSpec((bb, C, tr, _LANES), lambda bi, ti: (bi, 0, ti, 0)),
        ),
        compiler_params=pltpu.CompilerParams(
            dimension_semantics=("parallel", "parallel")),
        cost_estimate=cost,
    )(sscale, w_flat, c_eff, x_4d)

    out_flat = out_4d.reshape(B, C, R * _LANES)[:, :, :HW]
    return out_flat.reshape(B, C, H, W)


def _reference(x, sigma, w, b, c_cond, c_uncond, cond_scale):
    # Unfolded math, matching the original module's op ordering.
    # Note: the kernel reassociates ((h+c)*s) as h*(w*s) + c*s; not bit-exact,
    # but well within rtol/atol 1e-5 for these magnitudes.
    s = (1.0 / (1.0 + sigma.astype(jnp.float32) ** 2))[:, None, None, None]
    h = jnp.einsum('bkhw,kc->bchw', x, w) + b[None, :, None, None]
    cond_pred = (h + c_cond[None, :, None, None]) * s
    uncond_pred = (h + c_uncond[None, :, None, None]) * s
    out_cond = cond_pred / (1.0 + 1e-37)
    out_uncond = uncond_pred / (1.0 + 1e-37)
    return out_uncond + (out_cond - out_uncond) * cond_scale


if __name__ == "__main__":
    key = jax.random.PRNGKey(0)
    k1, k2, k3, k4, k5, k6 = jax.random.split(key, 6)

    B, C, H, W = 2, 4, 16, 16
    x = jax.random.normal(k1, (B, C, H, W), dtype=jnp.float32)
    sigma = jnp.abs(jax.random.normal(k2, (B,), dtype=jnp.float32)) + 0.5
    w_mat = jax.random.normal(k3, (C, C), dtype=jnp.float32) * 0.2
    b_vec = jax.random.normal(k4, (C,), dtype=jnp.float32) * 0.1
    c_cond = jax.random.normal(k5, (C,), dtype=jnp.float32) * 0.3
    c_uncond = jax.random.normal(k6, (C,), dtype=jnp.float32) * 0.3
    cond_scale = 7.5

    out = cfg_noise_predictor(x, sigma, w_mat, b_vec, c_cond, c_uncond, cond_scale)
    out = jax.block_until_ready(out)

    ref = _reference(x, sigma, w_mat, b_vec, c_cond, c_uncond, cond_scale)
    assert out.shape == (B, C, H, W)
    assert jnp.allclose(out, ref, rtol=1e-5, atol=1e-5), "mismatch vs reference"
    print("KERNEL_OK")
</pallas_src>

<mosaic_0001>
module attributes {stable_mosaic.version = 11 : i64} {
  func.func @_cfg_kernel(%arg0: i32, %arg1: i32, %arg2: memref<2xf32, #tpu.memory_space<smem>>, %arg3: memref<16xf32, #tpu.memory_space<smem>>, %arg4: memref<4xf32, #tpu.memory_space<smem>>, %arg5: memref<2x4x2x128xf32, #tpu.memory_space<vmem>>, %arg6: memref<2x4x2x128xf32, #tpu.memory_space<vmem>>) attributes {dimension_semantics = [#tpu.dimension_semantics<parallel>, #tpu.dimension_semantics<parallel>], iteration_bounds = array<i64: 1, 1>, scalar_prefetch = 0 : i64, scratch_operands = 0 : i64, tpu.core_type = #tpu.core_type<tc>, window_params = [{transform_indices = @transform_0, window_bounds = array<i64: 2>}, {transform_indices = @transform_1, window_bounds = array<i64: 16>}, {transform_indices = @transform_2, window_bounds = array<i64: 4>}, {transform_indices = @transform_3, window_bounds = array<i64: 2, 4, 2, 128>}, {transform_indices = @transform_4, window_bounds = array<i64: 2, 4, 2, 128>}]} {
    %c2_i32 = arith.constant 2 : i32
    %0 = arith.muli %arg0, %c2_i32 : i32
    %c0_i32 = arith.constant 0 : i32
    %1 = arith.addi %0, %c0_i32 : i32
    %2 = arith.index_cast %1 : i32 to index
    %3 = memref.load %arg2[%2] : memref<2xf32, #tpu.memory_space<smem>>
    %c0 = arith.constant 0 : index
    %c0_0 = arith.constant 0 : index
    %c0_1 = arith.constant 0 : index
    %c0_2 = arith.constant 0 : index
    %4 = vector.load %arg5[%c0, %c0_0, %c0_1, %c0_2] : memref<2x4x2x128xf32, #tpu.memory_space<vmem>>, vector<1x1x2x128xf32>
    %5 = vector.shape_cast %4 : vector<1x1x2x128xf32> to vector<2x128xf32>
    %c0_3 = arith.constant 0 : index
    %6 = memref.load %arg3[%c0_3] : memref<16xf32, #tpu.memory_space<smem>>
    %7 = arith.mulf %6, %3 : f32
    %8 = vector.broadcast %7 : f32 to vector<2x128xf32>
    %9 = arith.mulf %5, %8 : vector<2x128xf32>
    %c0_4 = arith.constant 0 : index
    %10 = memref.load %arg4[%c0_4] : memref<4xf32, #tpu.memory_space<smem>>
    %11 = arith.mulf %10, %3 : f32
    %12 = vector.broadcast %11 : f32 to vector<2x128xf32>
    %13 = arith.addf %9, %12 : vector<2x128xf32>
    %c0_5 = arith.constant 0 : index
    %c1 = arith.constant 1 : index
    %c0_6 = arith.constant 0 : index
    %c0_7 = arith.constant 0 : index
    %14 = vector.load %arg5[%c0_5, %c1, %c0_6, %c0_7] : memref<2x4x2x128xf32, #tpu.memory_space<vmem>>, vector<1x1x2x128xf32>
    %15 = vector.shape_cast %14 : vector<1x1x2x128xf32> to vector<2x128xf32>
    %c4 = arith.constant 4 : index
    %16 = memref.load %arg3[%c4] : memref<16xf32, #tpu.memory_space<smem>>
    %17 = arith.mulf %16, %3 : f32
    %18 = vector.broadcast %17 : f32 to vector<2x128xf32>
    %19 = arith.mulf %15, %18 : vector<2x128xf32>
    %20 = arith.addf %13, %19 : vector<2x128xf32>
    %c0_8 = arith.constant 0 : index
    %c2 = arith.constant 2 : index
    %c0_9 = arith.constant 0 : index
    %c0_10 = arith.constant 0 : index
    %21 = vector.load %arg5[%c0_8, %c2, %c0_9, %c0_10] : memref<2x4x2x128xf32, #tpu.memory_space<vmem>>, vector<1x1x2x128xf32>
    %22 = vector.shape_cast %21 : vector<1x1x2x128xf32> to vector<2x128xf32>
    %c8 = arith.constant 8 : index
    %23 = memref.load %arg3[%c8] : memref<16xf32, #tpu.memory_space<smem>>
    %24 = arith.mulf %23, %3 : f32
    %25 = vector.broadcast %24 : f32 to vector<2x128xf32>
    %26 = arith.mulf %22, %25 : vector<2x128xf32>
    %27 = arith.addf %20, %26 : vector<2x128xf32>
    %c0_11 = arith.constant 0 : index
    %c3 = arith.constant 3 : index
    %c0_12 = arith.constant 0 : index
    %c0_13 = arith.constant 0 : index
    %28 = vector.load %arg5[%c0_11, %c3, %c0_12, %c0_13] : memref<2x4x2x128xf32, #tpu.memory_space<vmem>>, vector<1x1x2x128xf32>
    %29 = vector.shape_cast %28 : vector<1x1x2x128xf32> to vector<2x128xf32>
    %c12 = arith.constant 12 : index
    %30 = memref.load %arg3[%c12] : memref<16xf32, #tpu.memory_space<smem>>
    %31 = arith.mulf %30, %3 : f32
    %32 = vector.broadcast %31 : f32 to vector<2x128xf32>
    %33 = arith.mulf %29, %32 : vector<2x128xf32>
    %34 = arith.addf %27, %33 : vector<2x128xf32>
    %c0_14 = arith.constant 0 : index
    %c0_15 = arith.constant 0 : index
    %c0_16 = arith.constant 0 : index
    %c0_17 = arith.constant 0 : index
    %35 = vector.load %arg6[%c0_14, %c0_15, %c0_16, %c0_17] : memref<2x4x2x128xf32, #tpu.memory_space<vmem>>, vector<1x1x2x128xf32>
    %36 = vector.shape_cast %35 : vector<1x1x2x128xf32> to vector<2x128xf32>
    %37 = vector.shape_cast %34 : vector<2x128xf32> to vector<1x1x2x128xf32>
    tpu.vector_store %arg6[%c0_14, %c0_15, %c0_16, %c0_17], %37 {strides = array<i32>} : memref<2x4x2x128xf32, #tpu.memory_space<vmem>>, vector<1x1x2x128xf32>,
    %c0_18 = arith.constant 0 : index
    %c0_19 = arith.constant 0 : index
    %c0_20 = arith.constant 0 : index
    %c0_21 = arith.constant 0 : index
    %38 = vector.load %arg5[%c0_18, %c0_19, %c0_20, %c0_21] : memref<2x4x2x128xf32, #tpu.memory_space<vmem>>, vector<1x1x2x128xf32>
    %39 = vector.shape_cast %38 : vector<1x1x2x128xf32> to vector<2x128xf32>
    %c1_22 = arith.constant 1 : index
    %40 = memref.load %arg3[%c1_22] : memref<16xf32, #tpu.memory_space<smem>>
    %41 = arith.mulf %40, %3 : f32
    %42 = vector.broadcast %41 : f32 to vector<2x128xf32>
    %43 = arith.mulf %39, %42 : vector<2x128xf32>
    %c1_23 = arith.constant 1 : index
    %44 = memref.load %arg4[%c1_23] : memref<4xf32, #tpu.memory_space<smem>>
    %45 = arith.mulf %44, %3 : f32
    %46 = vector.broadcast %45 : f32 to vector<2x128xf32>
    %47 = arith.addf %43, %46 : vector<2x128xf32>
    %c0_24 = arith.constant 0 : index
    %c1_25 = arith.constant 1 : index
    %c0_26 = arith.constant 0 : index
    %c0_27 = arith.constant 0 : index
    %48 = vector.load %arg5[%c0_24, %c1_25, %c0_26, %c0_27] : memref<2x4x2x128xf32, #tpu.memory_space<vmem>>, vector<1x1x2x128xf32>
    %49 = vector.shape_cast %48 : vector<1x1x2x128xf32> to vector<2x128xf32>
    %c5 = arith.constant 5 : index
    %50 = memref.load %arg3[%c5] : memref<16xf32, #tpu.memory_space<smem>>
    %51 = arith.mulf %50, %3 : f32
    %52 = vector.broadcast %51 : f32 to vector<2x128xf32>
    %53 = arith.mulf %49, %52 : vector<2x128xf32>
    %54 = arith.addf %47, %53 : vector<2x128xf32>
    %c0_28 = arith.constant 0 : index
    %c2_29 = arith.constant 2 : index
    %c0_30 = arith.constant 0 : index
    %c0_31 = arith.constant 0 : index
    %55 = vector.load %arg5[%c0_28, %c2_29, %c0_30, %c0_31] : memref<2x4x2x128xf32, #tpu.memory_space<vmem>>, vector<1x1x2x128xf32>
    %56 = vector.shape_cast %55 : vector<1x1x2x128xf32> to vector<2x128xf32>
    %c9 = arith.constant 9 : index
    %57 = memref.load %arg3[%c9] : memref<16xf32, #tpu.memory_space<smem>>
    %58 = arith.mulf %57, %3 : f32
    %59 = vector.broadcast %58 : f32 to vector<2x128xf32>
    %60 = arith.mulf %56, %59 : vector<2x128xf32>
    %61 = arith.addf %54, %60 : vector<2x128xf32>
    %c0_32 = arith.constant 0 : index
    %c3_33 = arith.constant 3 : index
    %c0_34 = arith.constant 0 : index
    %c0_35 = arith.constant 0 : index
    %62 = vector.load %arg5[%c0_32, %c3_33, %c0_34, %c0_35] : memref<2x4x2x128xf32, #tpu.memory_space<vmem>>, vector<1x1x2x128xf32>
    %63 = vector.shape_cast %62 : vector<1x1x2x128xf32> to vector<2x128xf32>
    %c13 = arith.constant 13 : index
    %64 = memref.load %arg3[%c13] : memref<16xf32, #tpu.memory_space<smem>>
    %65 = arith.mulf %64, %3 : f32
    %66 = vector.broadcast %65 : f32 to vector<2x128xf32>
    %67 = arith.mulf %63, %66 : vector<2x128xf32>
    %68 = arith.addf %61, %67 : vector<2x128xf32>
    %c0_36 = arith.constant 0 : index
    %c1_37 = arith.constant 1 : index
    %c0_38 = arith.constant 0 : index
    %c0_39 = arith.constant 0 : index
    %69 = vector.load %arg6[%c0_36, %c1_37, %c0_38, %c0_39] : memref<2x4x2x128xf32, #tpu.memory_space<vmem>>, vector<1x1x2x128xf32>
    %70 = vector.shape_cast %69 : vector<1x1x2x128xf32> to vector<2x128xf32>
    %71 = vector.shape_cast %68 : vector<2x128xf32> to vector<1x1x2x128xf32>
    tpu.vector_store %arg6[%c0_36, %c1_37, %c0_38, %c0_39], %71 {strides = array<i32>} : memref<2x4x2x128xf32, #tpu.memory_space<vmem>>, vector<1x1x2x128xf32>,
    %c0_40 = arith.constant 0 : index
    %c0_41 = arith.constant 0 : index
    %c0_42 = arith.constant 0 : index
    %c0_43 = arith.constant 0 : index
    %72 = vector.load %arg5[%c0_40, %c0_41, %c0_42, %c0_43] : memref<2x4x2x128xf32, #tpu.memory_space<vmem>>, vector<1x1x2x128xf32>
    %73 = vector.shape_cast %72 : vector<1x1x2x128xf32> to vector<2x128xf32>
    %c2_44 = arith.constant 2 : index
    %74 = memref.load %arg3[%c2_44] : memref<16xf32, #tpu.memory_space<smem>>
    %75 = arith.mulf %74, %3 : f32
    %76 = vector.broadcast %75 : f32 to vector<2x128xf32>
    %77 = arith.mulf %73, %76 : vector<2x128xf32>
    %c2_45 = arith.constant 2 : index
    %78 = memref.load %arg4[%c2_45] : memref<4xf32, #tpu.memory_space<smem>>
    %79 = arith.mulf %78, %3 : f32
    %80 = vector.broadcast %79 : f32 to vector<2x128xf32>
    %81 = arith.addf %77, %80 : vector<2x128xf32>
    %c0_46 = arith.constant 0 : index
    %c1_47 = arith.constant 1 : index
    %c0_48 = arith.constant 0 : index
    %c0_49 = arith.constant 0 : index
    %82 = vector.load %arg5[%c0_46, %c1_47, %c0_48, %c0_49] : memref<2x4x2x128xf32, #tpu.memory_space<vmem>>, vector<1x1x2x128xf32>
    %83 = vector.shape_cast %82 : vector<1x1x2x128xf32> to vector<2x128xf32>
    %c6 = arith.constant 6 : index
    %84 = memref.load %arg3[%c6] : memref<16xf32, #tpu.memory_space<smem>>
    %85 = arith.mulf %84, %3 : f32
    %86 = vector.broadcast %85 : f32 to vector<2x128xf32>
    %87 = arith.mulf %83, %86 : vector<2x128xf32>
    %88 = arith.addf %81, %87 : vector<2x128xf32>
    %c0_50 = arith.constant 0 : index
    %c2_51 = arith.constant 2 : index
    %c0_52 = arith.constant 0 : index
    %c0_53 = arith.constant 0 : index
    %89 = vector.load %arg5[%c0_50, %c2_51, %c0_52, %c0_53] : memref<2x4x2x128xf32, #tpu.memory_space<vmem>>, vector<1x1x2x128xf32>
    %90 = vector.shape_cast %89 : vector<1x1x2x128xf32> to vector<2x128xf32>
    %c10 = arith.constant 10 : index
    %91 = memref.load %arg3[%c10] : memref<16xf32, #tpu.memory_space<smem>>
    %92 = arith.mulf %91, %3 : f32
    %93 = vector.broadcast %92 : f32 to vector<2x128xf32>
    %94 = arith.mulf %90, %93 : vector<2x128xf32>
    %95 = arith.addf %88, %94 : vector<2x128xf32>
    %c0_54 = arith.constant 0 : index
    %c3_55 = arith.constant 3 : index
    %c0_56 = arith.constant 0 : index
    %c0_57 = arith.constant 0 : index
    %96 = vector.load %arg5[%c0_54, %c3_55, %c0_56, %c0_57] : memref<2x4x2x128xf32, #tpu.memory_space<vmem>>, vector<1x1x2x128xf32>
    %97 = vector.shape_cast %96 : vector<1x1x2x128xf32> to vector<2x128xf32>
    %c14 = arith.constant 14 : index
    %98 = memref.load %arg3[%c14] : memref<16xf32, #tpu.memory_space<smem>>
    %99 = arith.mulf %98, %3 : f32
    %100 = vector.broadcast %99 : f32 to vector<2x128xf32>
    %101 = arith.mulf %97, %100 : vector<2x128xf32>
    %102 = arith.addf %95, %101 : vector<2x128xf32>
    %c0_58 = arith.constant 0 : index
    %c2_59 = arith.constant 2 : index
    %c0_60 = arith.constant 0 : index
    %c0_61 = arith.constant 0 : index
    %103 = vector.load %arg6[%c0_58, %c2_59, %c0_60, %c0_61] : memref<2x4x2x128xf32, #tpu.memory_space<vmem>>, vector<1x1x2x128xf32>
    %104 = vector.shape_cast %103 : vector<1x1x2x128xf32> to vector<2x128xf32>
    %105 = vector.shape_cast %102 : vector<2x128xf32> to vector<1x1x2x128xf32>
    tpu.vector_store %arg6[%c0_58, %c2_59, %c0_60, %c0_61], %105 {strides = array<i32>} : memref<2x4x2x128xf32, #tpu.memory_space<vmem>>, vector<1x1x2x128xf32>,
    %c0_62 = arith.constant 0 : index
    %c0_63 = arith.constant 0 : index
    %c0_64 = arith.constant 0 : index
    %c0_65 = arith.constant 0 : index
    %106 = vector.load %arg5[%c0_62, %c0_63, %c0_64, %c0_65] : memref<2x4x2x128xf32, #tpu.memory_space<vmem>>, vector<1x1x2x128xf32>
    %107 = vector.shape_cast %106 : vector<1x1x2x128xf32> to vector<2x128xf32>
    %c3_66 = arith.constant 3 : index
    %108 = memref.load %arg3[%c3_66] : memref<16xf32, #tpu.memory_space<smem>>
    %109 = arith.mulf %108, %3 : f32
    %110 = vector.broadcast %109 : f32 to vector<2x128xf32>
    %111 = arith.mulf %107, %110 : vector<2x128xf32>
    %c3_67 = arith.constant 3 : index
    %112 = memref.load %arg4[%c3_67] : memref<4xf32, #tpu.memory_space<smem>>
    %113 = arith.mulf %112, %3 : f32
    %114 = vector.broadcast %113 : f32 to vector<2x128xf32>
    %115 = arith.addf %111, %114 : vector<2x128xf32>
    %c0_68 = arith.constant 0 : index
    %c1_69 = arith.constant 1 : index
    %c0_70 = arith.constant 0 : index
    %c0_71 = arith.constant 0 : index
    %116 = vector.load %arg5[%c0_68, %c1_69, %c0_70, %c0_71] : memref<2x4x2x128xf32, #tpu.memory_space<vmem>>, vector<1x1x2x128xf32>
    %117 = vector.shape_cast %116 : vector<1x1x2x128xf32> to vector<2x128xf32>
    %c7 = arith.constant 7 : index
    %118 = memref.load %arg3[%c7] : memref<16xf32, #tpu.memory_space<smem>>
    %119 = arith.mulf %118, %3 : f32
    %120 = vector.broadcast %119 : f32 to vector<2x128xf32>
    %121 = arith.mulf %117, %120 : vector<2x128xf32>
    %122 = arith.addf %115, %121 : vector<2x128xf32>
    %c0_72 = arith.constant 0 : index
    %c2_73 = arith.constant 2 : index
    %c0_74 = arith.constant 0 : index
    %c0_75 = arith.constant 0 : index
    %123 = vector.load %arg5[%c0_72, %c2_73, %c0_74, %c0_75] : memref<2x4x2x128xf32, #tpu.memory_space<vmem>>, vector<1x1x2x128xf32>
    %124 = vector.shape_cast %123 : vector<1x1x2x128xf32> to vector<2x128xf32>
    %c11 = arith.constant 11 : index
    %125 = memref.load %arg3[%c11] : memref<16xf32, #tpu.memory_space<smem>>
    %126 = arith.mulf %125, %3 : f32
    %127 = vector.broadcast %126 : f32 to vector<2x128xf32>
    %128 = arith.mulf %124, %127 : vector<2x128xf32>
    %129 = arith.addf %122, %128 : vector<2x128xf32>
    %c0_76 = arith.constant 0 : index
    %c3_77 = arith.constant 3 : index
    %c0_78 = arith.constant 0 : index
    %c0_79 = arith.constant 0 : index
    %130 = vector.load %arg5[%c0_76, %c3_77, %c0_78, %c0_79] : memref<2x4x2x128xf32, #tpu.memory_space<vmem>>, vector<1x1x2x128xf32>
    %131 = vector.shape_cast %130 : vector<1x1x2x128xf32> to vector<2x128xf32>
    %c15 = arith.constant 15 : index
    %132 = memref.load %arg3[%c15] : memref<16xf32, #tpu.memory_space<smem>>
    %133 = arith.mulf %132, %3 : f32
    %134 = vector.broadcast %133 : f32 to vector<2x128xf32>
    %135 = arith.mulf %131, %134 : vector<2x128xf32>
    %136 = arith.addf %129, %135 : vector<2x128xf32>
    %c0_80 = arith.constant 0 : index
    %c3_81 = arith.constant 3 : index
    %c0_82 = arith.constant 0 : index
    %c0_83 = arith.constant 0 : index
    %137 = vector.load %arg6[%c0_80, %c3_81, %c0_82, %c0_83] : memref<2x4x2x128xf32, #tpu.memory_space<vmem>>, vector<1x1x2x128xf32>
    %138 = vector.shape_cast %137 : vector<1x1x2x128xf32> to vector<2x128xf32>
    %139 = vector.shape_cast %136 : vector<2x128xf32> to vector<1x1x2x128xf32>
    tpu.vector_store %arg6[%c0_80, %c3_81, %c0_82, %c0_83], %139 {strides = array<i32>} : memref<2x4x2x128xf32, #tpu.memory_space<vmem>>, vector<1x1x2x128xf32>,
    %c1_i32 = arith.constant 1 : i32
    %140 = arith.addi %0, %c1_i32 : i32
    %141 = arith.index_cast %140 : i32 to index
    %142 = memref.load %arg2[%141] : memref<2xf32, #tpu.memory_space<smem>>
    %c1_84 = arith.constant 1 : index
    %c0_85 = arith.constant 0 : index
    %c0_86 = arith.constant 0 : index
    %c0_87 = arith.constant 0 : index
    %143 = vector.load %arg5[%c1_84, %c0_85, %c0_86, %c0_87] : memref<2x4x2x128xf32, #tpu.memory_space<vmem>>, vector<1x1x2x128xf32>
    %144 = vector.shape_cast %143 : vector<1x1x2x128xf32> to vector<2x128xf32>
    %c0_88 = arith.constant 0 : index
    %145 = memref.load %arg3[%c0_88] : memref<16xf32, #tpu.memory_space<smem>>
    %146 = arith.mulf %145, %142 : f32
    %147 = vector.broadcast %146 : f32 to vector<2x128xf32>
    %148 = arith.mulf %144, %147 : vector<2x128xf32>
    %c0_89 = arith.constant 0 : index
    %149 = memref.load %arg4[%c0_89] : memref<4xf32, #tpu.memory_space<smem>>
    %150 = arith.mulf %149, %142 : f32
    %151 = vector.broadcast %150 : f32 to vector<2x128xf32>
    %152 = arith.addf %148, %151 : vector<2x128xf32>
    %c1_90 = arith.constant 1 : index
    %c1_91 = arith.constant 1 : index
    %c0_92 = arith.constant 0 : index
    %c0_93 = arith.constant 0 : index
    %153 = vector.load %arg5[%c1_90, %c1_91, %c0_92, %c0_93] : memref<2x4x2x128xf32, #tpu.memory_space<vmem>>, vector<1x1x2x128xf32>
    %154 = vector.shape_cast %153 : vector<1x1x2x128xf32> to vector<2x128xf32>
    %c4_94 = arith.constant 4 : index
    %155 = memref.load %arg3[%c4_94] : memref<16xf32, #tpu.memory_space<smem>>
    %156 = arith.mulf %155, %142 : f32
    %157 = vector.broadcast %156 : f32 to vector<2x128xf32>
    %158 = arith.mulf %154, %157 : vector<2x128xf32>
    %159 = arith.addf %152, %158 : vector<2x128xf32>
    %c1_95 = arith.constant 1 : index
    %c2_96 = arith.constant 2 : index
    %c0_97 = arith.constant 0 : index
    %c0_98 = arith.constant 0 : index
    %160 = vector.load %arg5[%c1_95, %c2_96, %c0_97, %c0_98] : memref<2x4x2x128xf32, #tpu.memory_space<vmem>>, vector<1x1x2x128xf32>
    %161 = vector.shape_cast %160 : vector<1x1x2x128xf32> to vector<2x128xf32>
    %c8_99 = arith.constant 8 : index
    %162 = memref.load %arg3[%c8_99] : memref<16xf32, #tpu.memory_space<smem>>
    %163 = arith.mulf %162, %142 : f32
    %164 = vector.broadcast %163 : f32 to vector<2x128xf32>
    %165 = arith.mulf %161, %164 : vector<2x128xf32>
    %166 = arith.addf %159, %165 : vector<2x128xf32>
    %c1_100 = arith.constant 1 : index
    %c3_101 = arith.constant 3 : index
    %c0_102 = arith.constant 0 : index
    %c0_103 = arith.constant 0 : index
    %167 = vector.load %arg5[%c1_100, %c3_101, %c0_102, %c0_103] : memref<2x4x2x128xf32, #tpu.memory_space<vmem>>, vector<1x1x2x128xf32>
    %168 = vector.shape_cast %167 : vector<1x1x2x128xf32> to vector<2x128xf32>
    %c12_104 = arith.constant 12 : index
    %169 = memref.load %arg3[%c12_104] : memref<16xf32, #tpu.memory_space<smem>>
    %170 = arith.mulf %169, %142 : f32
    %171 = vector.broadcast %170 : f32 to vector<2x128xf32>
    %172 = arith.mulf %168, %171 : vector<2x128xf32>
    %173 = arith.addf %166, %172 : vector<2x128xf32>
    %c1_105 = arith.constant 1 : index
    %c0_106 = arith.constant 0 : index
    %c0_107 = arith.constant 0 : index
    %c0_108 = arith.constant 0 : index
    %174 = vector.load %arg6[%c1_105, %c0_106, %c0_107, %c0_108] : memref<2x4x2x128xf32, #tpu.memory_space<vmem>>, vector<1x1x2x128xf32>
    %175 = vector.shape_cast %174 : vector<1x1x2x128xf32> to vector<2x128xf32>
    %176 = vector.shape_cast %173 : vector<2x128xf32> to vector<1x1x2x128xf32>
    tpu.vector_store %arg6[%c1_105, %c0_106, %c0_107, %c0_108], %176 {strides = array<i32>} : memref<2x4x2x128xf32, #tpu.memory_space<vmem>>, vector<1x1x2x128xf32>,
    %c1_109 = arith.constant 1 : index
    %c0_110 = arith.constant 0 : index
    %c0_111 = arith.constant 0 : index
    %c0_112 = arith.constant 0 : index
    %177 = vector.load %arg5[%c1_109, %c0_110, %c0_111, %c0_112] : memref<2x4x2x128xf32, #tpu.memory_space<vmem>>, vector<1x1x2x128xf32>
    %178 = vector.shape_cast %177 : vector<1x1x2x128xf32> to vector<2x128xf32>
    %c1_113 = arith.constant 1 : index
    %179 = memref.load %arg3[%c1_113] : memref<16xf32, #tpu.memory_space<smem>>
    %180 = arith.mulf %179, %142 : f32
    %181 = vector.broadcast %180 : f32 to vector<2x128xf32>
    %182 = arith.mulf %178, %181 : vector<2x128xf32>
    %c1_114 = arith.constant 1 : index
    %183 = memref.load %arg4[%c1_114] : memref<4xf32, #tpu.memory_space<smem>>
    %184 = arith.mulf %183, %142 : f32
    %185 = vector.broadcast %184 : f32 to vector<2x128xf32>
    %186 = arith.addf %182, %185 : vector<2x128xf32>
    %c1_115 = arith.constant 1 : index
    %c1_116 = arith.constant 1 : index
    %c0_117 = arith.constant 0 : index
    %c0_118 = arith.constant 0 : index
    %187 = vector.load %arg5[%c1_115, %c1_116, %c0_117, %c0_118] : memref<2x4x2x128xf32, #tpu.memory_space<vmem>>, vector<1x1x2x128xf32>
    %188 = vector.shape_cast %187 : vector<1x1x2x128xf32> to vector<2x128xf32>
    %c5_119 = arith.constant 5 : index
    %189 = memref.load %arg3[%c5_119] : memref<16xf32, #tpu.memory_space<smem>>
    %190 = arith.mulf %189, %142 : f32
    %191 = vector.broadcast %190 : f32 to vector<2x128xf32>
    %192 = arith.mulf %188, %191 : vector<2x128xf32>
    %193 = arith.addf %186, %192 : vector<2x128xf32>
    %c1_120 = arith.constant 1 : index
    %c2_121 = arith.constant 2 : index
    %c0_122 = arith.constant 0 : index
    %c0_123 = arith.constant 0 : index
    %194 = vector.load %arg5[%c1_120, %c2_121, %c0_122, %c0_123] : memref<2x4x2x128xf32, #tpu.memory_space<vmem>>, vector<1x1x2x128xf32>
    %195 = vector.shape_cast %194 : vector<1x1x2x128xf32> to vector<2x128xf32>
    %c9_124 = arith.constant 9 : index
    %196 = memref.load %arg3[%c9_124] : memref<16xf32, #tpu.memory_space<smem>>
    %197 = arith.mulf %196, %142 : f32
    %198 = vector.broadcast %197 : f32 to vector<2x128xf32>
    %199 = arith.mulf %195, %198 : vector<2x128xf32>
    %200 = arith.addf %193, %199 : vector<2x128xf32>
    %c1_125 = arith.constant 1 : index
    %c3_126 = arith.constant 3 : index
    %c0_127 = arith.constant 0 : index
    %c0_128 = arith.constant 0 : index
    %201 = vector.load %arg5[%c1_125, %c3_126, %c0_127, %c0_128] : memref<2x4x2x128xf32, #tpu.memory_space<vmem>>, vector<1x1x2x128xf32>
    %202 = vector.shape_cast %201 : vector<1x1x2x128xf32> to vector<2x128xf32>
    %c13_129 = arith.constant 13 : index
    %203 = memref.load %arg3[%c13_129] : memref<16xf32, #tpu.memory_space<smem>>
    %204 = arith.mulf %203, %142 : f32
    %205 = vector.broadcast %204 : f32 to vector<2x128xf32>
    %206 = arith.mulf %202, %205 : vector<2x128xf32>
    %207 = arith.addf %200, %206 : vector<2x128xf32>
    %c1_130 = arith.constant 1 : index
    %c1_131 = arith.constant 1 : index
    %c0_132 = arith.constant 0 : index
    %c0_133 = arith.constant 0 : index
    %208 = vector.load %arg6[%c1_130, %c1_131, %c0_132, %c0_133] : memref<2x4x2x128xf32, #tpu.memory_space<vmem>>, vector<1x1x2x128xf32>
    %209 = vector.shape_cast %208 : vector<1x1x2x128xf32> to vector<2x128xf32>
    %210 = vector.shape_cast %207 : vector<2x128xf32> to vector<1x1x2x128xf32>
    tpu.vector_store %arg6[%c1_130, %c1_131, %c0_132, %c0_133], %210 {strides = array<i32>} : memref<2x4x2x128xf32, #tpu.memory_space<vmem>>, vector<1x1x2x128xf32>,
    %c1_134 = arith.constant 1 : index
    %c0_135 = arith.constant 0 : index
    %c0_136 = arith.constant 0 : index
    %c0_137 = arith.constant 0 : index
    %211 = vector.load %arg5[%c1_134, %c0_135, %c0_136, %c0_137] : memref<2x4x2x128xf32, #tpu.memory_space<vmem>>, vector<1x1x2x128xf32>
    %212 = vector.shape_cast %211 : vector<1x1x2x128xf32> to vector<2x128xf32>
    %c2_138 = arith.constant 2 : index
    %213 = memref.load %arg3[%c2_138] : memref<16xf32, #tpu.memory_space<smem>>
    %214 = arith.mulf %213, %142 : f32
    %215 = vector.broadcast %214 : f32 to vector<2x128xf32>
    %216 = arith.mulf %212, %215 : vector<2x128xf32>
    %c2_139 = arith.constant 2 : index
    %217 = memref.load %arg4[%c2_139] : memref<4xf32, #tpu.memory_space<smem>>
    %218 = arith.mulf %217, %142 : f32
    %219 = vector.broadcast %218 : f32 to vector<2x128xf32>
    %220 = arith.addf %216, %219 : vector<2x128xf32>
    %c1_140 = arith.constant 1 : index
    %c1_141 = arith.constant 1 : index
    %c0_142 = arith.constant 0 : index
    %c0_143 = arith.constant 0 : index
    %221 = vector.load %arg5[%c1_140, %c1_141, %c0_142, %c0_143] : memref<2x4x2x128xf32, #tpu.memory_space<vmem>>, vector<1x1x2x128xf32>
    %222 = vector.shape_cast %221 : vector<1x1x2x128xf32> to vector<2x128xf32>
    %c6_144 = arith.constant 6 : index
    %223 = memref.load %arg3[%c6_144] : memref<16xf32, #tpu.memory_space<smem>>
    %224 = arith.mulf %223, %142 : f32
    %225 = vector.broadcast %224 : f32 to vector<2x128xf32>
    %226 = arith.mulf %222, %225 : vector<2x128xf32>
    %227 = arith.addf %220, %226 : vector<2x128xf32>
    %c1_145 = arith.constant 1 : index
    %c2_146 = arith.constant 2 : index
    %c0_147 = arith.constant 0 : index
    %c0_148 = arith.constant 0 : index
    %228 = vector.load %arg5[%c1_145, %c2_146, %c0_147, %c0_148] : memref<2x4x2x128xf32, #tpu.memory_space<vmem>>, vector<1x1x2x128xf32>
    %229 = vector.shape_cast %228 : vector<1x1x2x128xf32> to vector<2x128xf32>
    %c10_149 = arith.constant 10 : index
    %230 = memref.load %arg3[%c10_149] : memref<16xf32, #tpu.memory_space<smem>>
    %231 = arith.mulf %230, %142 : f32
    %232 = vector.broadcast %231 : f32 to vector<2x128xf32>
    %233 = arith.mulf %229, %232 : vector<2x128xf32>
    %234 = arith.addf %227, %233 : vector<2x128xf32>
    %c1_150 = arith.constant 1 : index
    %c3_151 = arith.constant 3 : index
    %c0_152 = arith.constant 0 : index
    %c0_153 = arith.constant 0 : index
    %235 = vector.load %arg5[%c1_150, %c3_151, %c0_152, %c0_153] : memref<2x4x2x128xf32, #tpu.memory_space<vmem>>, vector<1x1x2x128xf32>
    %236 = vector.shape_cast %235 : vector<1x1x2x128xf32> to vector<2x128xf32>
    %c14_154 = arith.constant 14 : index
    %237 = memref.load %arg3[%c14_154] : memref<16xf32, #tpu.memory_space<smem>>
    %238 = arith.mulf %237, %142 : f32
    %239 = vector.broadcast %238 : f32 to vector<2x128xf32>
    %240 = arith.mulf %236, %239 : vector<2x128xf32>
    %241 = arith.addf %234, %240 : vector<2x128xf32>
    %c1_155 = arith.constant 1 : index
    %c2_156 = arith.constant 2 : index
    %c0_157 = arith.constant 0 : index
    %c0_158 = arith.constant 0 : index
    %242 = vector.load %arg6[%c1_155, %c2_156, %c0_157, %c0_158] : memref<2x4x2x128xf32, #tpu.memory_space<vmem>>, vector<1x1x2x128xf32>
    %243 = vector.shape_cast %242 : vector<1x1x2x128xf32> to vector<2x128xf32>
    %244 = vector.shape_cast %241 : vector<2x128xf32> to vector<1x1x2x128xf32>
    tpu.vector_store %arg6[%c1_155, %c2_156, %c0_157, %c0_158], %244 {strides = array<i32>} : memref<2x4x2x128xf32, #tpu.memory_space<vmem>>, vector<1x1x2x128xf32>,
    %c1_159 = arith.constant 1 : index
    %c0_160 = arith.constant 0 : index
    %c0_161 = arith.constant 0 : index
    %c0_162 = arith.constant 0 : index
    %245 = vector.load %arg5[%c1_159, %c0_160, %c0_161, %c0_162] : memref<2x4x2x128xf32, #tpu.memory_space<vmem>>, vector<1x1x2x128xf32>
    %246 = vector.shape_cast %245 : vector<1x1x2x128xf32> to vector<2x128xf32>
    %c3_163 = arith.constant 3 : index
    %247 = memref.load %arg3[%c3_163] : memref<16xf32, #tpu.memory_space<smem>>
    %248 = arith.mulf %247, %142 : f32
    %249 = vector.broadcast %248 : f32 to vector<2x128xf32>
    %250 = arith.mulf %246, %249 : vector<2x128xf32>
    %c3_164 = arith.constant 3 : index
    %251 = memref.load %arg4[%c3_164] : memref<4xf32, #tpu.memory_space<smem>>
    %252 = arith.mulf %251, %142 : f32
    %253 = vector.broadcast %252 : f32 to vector<2x128xf32>
    %254 = arith.addf %250, %253 : vector<2x128xf32>
    %c1_165 = arith.constant 1 : index
    %c1_166 = arith.constant 1 : index
    %c0_167 = arith.constant 0 : index
    %c0_168 = arith.constant 0 : index
    %255 = vector.load %arg5[%c1_165, %c1_166, %c0_167, %c0_168] : memref<2x4x2x128xf32, #tpu.memory_space<vmem>>, vector<1x1x2x128xf32>
    %256 = vector.shape_cast %255 : vector<1x1x2x128xf32> to vector<2x128xf32>
    %c7_169 = arith.constant 7 : index
    %257 = memref.load %arg3[%c7_169] : memref<16xf32, #tpu.memory_space<smem>>
    %258 = arith.mulf %257, %142 : f32
    %259 = vector.broadcast %258 : f32 to vector<2x128xf32>
    %260 = arith.mulf %256, %259 : vector<2x128xf32>
    %261 = arith.addf %254, %260 : vector<2x128xf32>
    %c1_170 = arith.constant 1 : index
    %c2_171 = arith.constant 2 : index
    %c0_172 = arith.constant 0 : index
    %c0_173 = arith.constant 0 : index
    %262 = vector.load %arg5[%c1_170, %c2_171, %c0_172, %c0_173] : memref<2x4x2x128xf32, #tpu.memory_space<vmem>>, vector<1x1x2x128xf32>
    %263 = vector.shape_cast %262 : vector<1x1x2x128xf32> to vector<2x128xf32>
    %c11_174 = arith.constant 11 : index
    %264 = memref.load %arg3[%c11_174] : memref<16xf32, #tpu.memory_space<smem>>
    %265 = arith.mulf %264, %142 : f32
    %266 = vector.broadcast %265 : f32 to vector<2x128xf32>
    %267 = arith.mulf %263, %266 : vector<2x128xf32>
    %268 = arith.addf %261, %267 : vector<2x128xf32>
    %c1_175 = arith.constant 1 : index
    %c3_176 = arith.constant 3 : index
    %c0_177 = arith.constant 0 : index
    %c0_178 = arith.constant 0 : index
    %269 = vector.load %arg5[%c1_175, %c3_176, %c0_177, %c0_178] : memref<2x4x2x128xf32, #tpu.memory_space<vmem>>, vector<1x1x2x128xf32>
    %270 = vector.shape_cast %269 : vector<1x1x2x128xf32> to vector<2x128xf32>
    %c15_179 = arith.constant 15 : index
    %271 = memref.load %arg3[%c15_179] : memref<16xf32, #tpu.memory_space<smem>>
    %272 = arith.mulf %271, %142 : f32
    %273 = vector.broadcast %272 : f32 to vector<2x128xf32>
    %274 = arith.mulf %270, %273 : vector<2x128xf32>
    %275 = arith.addf %268, %274 : vector<2x128xf32>
    %c1_180 = arith.constant 1 : index
    %c3_181 = arith.constant 3 : index
    %c0_182 = arith.constant 0 : index
    %c0_183 = arith.constant 0 : index
    %276 = vector.load %arg6[%c1_180, %c3_181, %c0_182, %c0_183] : memref<2x4x2x128xf32, #tpu.memory_space<vmem>>, vector<1x1x2x128xf32>
    %277 = vector.shape_cast %276 : vector<1x1x2x128xf32> to vector<2x128xf32>
    %278 = vector.shape_cast %275 : vector<2x128xf32> to vector<1x1x2x128xf32>
    tpu.vector_store %arg6[%c1_180, %c3_181, %c0_182, %c0_183], %278 {strides = array<i32>} : memref<2x4x2x128xf32, #tpu.memory_space<vmem>>, vector<1x1x2x128xf32>,
    return
  }
  func.func @transform_0(%arg0: i32, %arg1: i32) -> i32 {
    %c0_i32 = arith.constant 0 : i32
    %c0_i32_0 = arith.constant 0 : i32
    return %c0_i32 : i32
  }
  func.func @transform_1(%arg0: i32, %arg1: i32) -> i32 {
    %c0_i32 = arith.constant 0 : i32
    %c0_i32_0 = arith.constant 0 : i32
    return %c0_i32 : i32
  }
  func.func @transform_2(%arg0: i32, %arg1: i32) -> i32 {
    %c0_i32 = arith.constant 0 : i32
    %c0_i32_0 = arith.constant 0 : i32
    return %c0_i32 : i32
  }
  func.func @transform_3(%arg0: i32, %arg1: i32) -> (i32, i32, i32, i32) {
    %c0_i32 = arith.constant 0 : i32
    %c0_i32_0 = arith.constant 0 : i32
    %c0_i32_1 = arith.constant 0 : i32
    return %arg0, %c0_i32, %arg1, %c0_i32_0 : i32, i32, i32, i32
  }
  func.func @transform_4(%arg0: i32, %arg1: i32) -> (i32, i32, i32, i32) {
    %c0_i32 = arith.constant 0 : i32
    %c0_i32_0 = arith.constant 0 : i32
    %c0_i32_1 = arith.constant 0 : i32
    return %arg0, %c0_i32, %arg1, %c0_i32_0 : i32, i32, i32, i32
  }
}

</mosaic_0001>

<llo_original>
// kernel: tpu_custom_call.1
$region0: #{tpu_custom_call.1}
  #allocation0 [shape = 'u32[]', space=smem, size = 0x4, offset = 0x4, fixed_abs, tag = 'smem constant byte address 0x4 - core index']
  #allocation1 [shape = 'u32[72,128]{1,0:T(1,128)}', space=vmem, size = 0x9000, scoped, tag = 'internal scratch']
  %s0 = inlined_call_operand.hbm [shape: f32[2], index: 0, kind: input, shape index: {}]
  %s1 = inlined_call_operand.hbm [shape: f32[16], index: 1, kind: input, shape index: {}]
  %s2 = inlined_call_operand.vmem [shape: f32[4], index: 2, kind: input, shape index: {}]
  %s3 = inlined_call_operand.hbm [shape: f32[2,4,2,128], index: 3, kind: input, shape index: {}]
  %s4 = inlined_call_operand.hbm [shape: f32[2,4,2,128], index: 4, kind: output, shape index: {}]
  %s5 = sld [smem:[#allocation0]]
  $region42: #{tpu_custom_call.1} parent=0
    _
  %s7 = ssub.s32 1, %s5
  %s8 = scalar_select 0, %s7, %s5
  $region1: #{tpu_custom_call.1} parent=0
    #allocation2 [shape = 'u8[512]{0}', space=smem, size = 0x200, scoped, tag = 'input window, operand 0, single buffered']
    #allocation3 [shape = 's32[1]{0}', space=sflag, size = 0x4, scoped, tag = 'scoped memory for tpu_custom_call.1']
    #allocation4 [shape = 's32[1]{0}', space=sflag, size = 0x4, scoped, tag = 'scoped memory for tpu_custom_call.1']
    #allocation5 [shape = 's32[1]{0}', space=sflag, size = 0x4, scoped, tag = 'scoped memory for tpu_custom_call.1']
    #allocation6 [shape = 's32[1]{0}', space=sflag, size = 0x4, scoped, tag = 'scoped memory for tpu_custom_call.1']
    #allocation7 [shape = 'u8[512]{0}', space=smem, size = 0x200, scoped, tag = 'input window, operand 1, single buffered']
    #allocation8 [shape = 's32[1]{0}', space=sflag, size = 0x4, scoped, tag = 'scoped memory for tpu_custom_call.1']
    #allocation9 [shape = 'u8[512]{0}', space=smem, size = 0x200, scoped, tag = 'input window, operand 2, single buffered']
    #allocation10 [shape = 'u8[8192]{0}', space=vmem, size = 0x2000, scoped, tag = 'input window, operand 3, single buffered']
    #allocation11 [shape = 'u8[8192]{0}', space=vmem, size = 0x2000, scoped, tag = 'output window, operand 0, single buffered']
    %9 = vsyncpa [#allocation5], 0
    %10 = vsyncpa [#allocation8], 0
    %11 = vsyncpa [#allocation6], 0
    %12 = vsyncpa [#allocation3], 0
    %13 = vsyncpa [#allocation4], 0
    // Predicated region
    $region2: #{tpu_custom_call.1} parent=1 // pred_check
      _
    $region3: #{tpu_custom_call.1} parent=1 // pred_check_branch
      %15 = sbr.rel (0) target = $region5
    $region4: #{tpu_custom_call.1} parent=1 // pred_region
      %17 = vsyncadd [#allocation5], 0
      %s19 = sshll.u32 %s0, 4
      %s20 = int_to_ptr.hbm [resolvable:$true] %s19
      %22 = dma.hbm_to_smem %s20, 16, [#allocation2], [#allocation5]
    $region5: #{tpu_custom_call.1} parent=1 // pred_fallthru
      _
    // Predicated region
    $region6: #{tpu_custom_call.1} parent=1 // pred_check
      _
    $region7: #{tpu_custom_call.1} parent=1 // pred_check_branch
      %24 = sbr.rel (0) target = $region9
    $region8: #{tpu_custom_call.1} parent=1 // pred_region
      %26 = vsyncadd [#allocation8], 0
      %s28 = sshll.u32 %s1, 4
      %s29 = int_to_ptr.hbm [resolvable:$true] %s28
      %31 = dma.hbm_to_smem %s29, 16, [#allocation7], [#allocation8]
    $region9: #{tpu_custom_call.1} parent=1 // pred_fallthru
      _
    // Predicated region
    $region10: #{tpu_custom_call.1} parent=1 // pred_check
      _
    $region11: #{tpu_custom_call.1} parent=1 // pred_check_branch
      %33 = sbr.rel (0) target = $region13
    $region12: #{tpu_custom_call.1} parent=1 // pred_region
      %35 = vsyncadd [#allocation6], 0
      %s37 = sshll.u32 %s2, 4
      %s38 = int_to_ptr.vmem [resolvable:$true] %s37
      %40 = dma.vmem_to_smem %s38, 16, [#allocation9], [#allocation6]
    $region13: #{tpu_custom_call.1} parent=1 // pred_fallthru
      _
    // Predicated region
    $region14: #{tpu_custom_call.1} parent=1 // pred_check
      _
    $region15: #{tpu_custom_call.1} parent=1 // pred_check_branch
      %42 = sbr.rel (0) target = $region17
    $region16: #{tpu_custom_call.1} parent=1 // pred_region
      %44 = vsyncadd [#allocation3], 0
      %s45 = sshll.u32 %s3, 4
      %s46 = int_to_ptr.hbm [resolvable:$true] %s45
      %s47 = sshll.u32 [#allocation10], 4
      %s48 = int_to_ptr.vmem [resolvable:$true] %s47
      %53 = dma.hbm_to_vmem [thread:$0]  %s46, 256, %s48, [#allocation3], 32, 32, 2
    $region17: #{tpu_custom_call.1} parent=1 // pred_fallthru
      _
    // Predicated region
    $region18: #{tpu_custom_call.1} parent=1 // pred_check
      _
    $region19: #{tpu_custom_call.1} parent=1 // pred_check_branch
      %55 = sbr.rel (0) target = $region21
    $region20: #{tpu_custom_call.1} parent=1 // pred_region
      %57 = dma.done [#allocation5], 16
    $region21: #{tpu_custom_call.1} parent=1 // pred_fallthru
      _
    // Predicated region
    $region22: #{tpu_custom_call.1} parent=1 // pred_check
      _
    $region23: #{tpu_custom_call.1} parent=1 // pred_check_branch
      %59 = sbr.rel (0) target = $region25
    $region24: #{tpu_custom_call.1} parent=1 // pred_region
      %61 = dma.done [#allocation8], 16
    $region25: #{tpu_custom_call.1} parent=1 // pred_fallthru
      _
    // Predicated region
    $region26: #{tpu_custom_call.1} parent=1 // pred_check
      _
    $region27: #{tpu_custom_call.1} parent=1 // pred_check_branch
      %63 = sbr.rel (0) target = $region29
    $region28: #{tpu_custom_call.1} parent=1 // pred_region
      %65 = dma.done [#allocation6], 16
    $region29: #{tpu_custom_call.1} parent=1 // pred_fallthru
      _
    // Predicated region
    $region30: #{tpu_custom_call.1} parent=1 // pred_check
      _
    $region31: #{tpu_custom_call.1} parent=1 // pred_check_branch
      %67 = sbr.rel (0) target = $region33
    $region32: #{tpu_custom_call.1} parent=1 // pred_region
      %69 = dma.done [#allocation3], 256
    $region33: #{tpu_custom_call.1} parent=1 // pred_fallthru
      _
    %70 = sfence
    %s71 = smul.u32 0, 2
    %s72 = sld [smem:[#allocation2 + %s71]]
    %v73 = vld [vmem:[#allocation10] sm:$0x3]
    %s74 = sld [smem:[#allocation7]]
    %s75 = smul.f32 %s74, %s72
    %v76 = vstv %s75
    %v77 = vmul.f32 %v73, %v76
    %s78 = sld [smem:[#allocation9]]
    %s79 = smul.f32 %s78, %s72
    %v80 = vstv %s79
    %v81 = vadd.f32 %v77, %v80
    %s82 = scalar_lea.vmem [#allocation10], 2
    %v83 = vld [vmem:[%s82] sm:$0x3]
    %s84 = sld [smem:[#allocation7 + $0x4]]
    %s85 = smul.f32 %s84, %s72
    %v86 = vstv %s85
    %v87 = vmul.f32 %v83, %v86
    %v88 = vadd.f32 %v81, %v87
    %s89 = scalar_lea.vmem [#allocation10], 4
    %v90 = vld [vmem:[%s89] sm:$0x3]
    %s91 = sld [smem:[#allocation7 + $0x8]]
    %s92 = smul.f32 %s91, %s72
    %v93 = vstv %s92
    %v94 = vmul.f32 %v90, %v93
    %v95 = vadd.f32 %v88, %v94
    %s96 = scalar_lea.vmem [#allocation10], 6
    %v97 = vld [vmem:[%s96] sm:$0x3]
    %s98 = sld [smem:[#allocation7 + $0xc]]
    %s99 = smul.f32 %s98, %s72
    %v100 = vstv %s99
    %v101 = vmul.f32 %v97, %v100
    %v102 = vadd.f32 %v95, %v101
    %103 = vst [vmem:[#allocation11] sm:$0x3] %v102
    %v104 = vld [vmem:[#allocation10] sm:$0x3]
    %s105 = sld [smem:[#allocation7 + $0x1]]
    %s106 = smul.f32 %s105, %s72
    %v107 = vstv %s106
    %v108 = vmul.f32 %v104, %v107
    %s109 = sld [smem:[#allocation9 + $0x1]]
    %s110 = smul.f32 %s109, %s72
    %v111 = vstv %s110
    %v112 = vadd.f32 %v108, %v111
    %v113 = vld [vmem:[%s82] sm:$0x3]
    %s114 = sld [smem:[#allocation7 + $0x5]]
    %s115 = smul.f32 %s114, %s72
    %v116 = vstv %s115
    %v117 = vmul.f32 %v113, %v116
    %v118 = vadd.f32 %v112, %v117
    %v119 = vld [vmem:[%s89] sm:$0x3]
    %s120 = sld [smem:[#allocation7 + $0x9]]
    %s121 = smul.f32 %s120, %s72
    %v122 = vstv %s121
    %v123 = vmul.f32 %v119, %v122
    %v124 = vadd.f32 %v118, %v123
    %v125 = vld [vmem:[%s96] sm:$0x3]
    %s126 = sld [smem:[#allocation7 + $0xd]]
    %s127 = smul.f32 %s126, %s72
    %v128 = vstv %s127
    %v129 = vmul.f32 %v125, %v128
    %v130 = vadd.f32 %v124, %v129
    %s131 = scalar_lea.vmem [#allocation11], 2
    %132 = vst [vmem:[%s131] sm:$0x3] %v130
    %v133 = vld [vmem:[#allocation10] sm:$0x3]
    %s134 = sld [smem:[#allocation7 + $0x2]]
    %s135 = smul.f32 %s134, %s72
    %v136 = vstv %s135
    %v137 = vmul.f32 %v133, %v136
    %s138 = sld [smem:[#allocation9 + $0x2]]
    %s139 = smul.f32 %s138, %s72
    %v140 = vstv %s139
    %v141 = vadd.f32 %v137, %v140
    %v142 = vld [vmem:[%s82] sm:$0x3]
    %s143 = sld [smem:[#allocation7 + $0x6]]
    %s144 = smul.f32 %s143, %s72
    %v145 = vstv %s144
    %v146 = vmul.f32 %v142, %v145
    %v147 = vadd.f32 %v141, %v146
    %v148 = vld [vmem:[%s89] sm:$0x3]
    %s149 = sld [smem:[#allocation7 + $0xa]]
    %s150 = smul.f32 %s149, %s72
    %v151 = vstv %s150
    %v152 = vmul.f32 %v148, %v151
    %v153 = vadd.f32 %v147, %v152
    %v154 = vld [vmem:[%s96] sm:$0x3]
    %s155 = sld [smem:[#allocation7 + $0xe]]
    %s156 = smul.f32 %s155, %s72
    %v157 = vstv %s156
    %v158 = vmul.f32 %v154, %v157
    %v159 = vadd.f32 %v153, %v158
    %s160 = scalar_lea.vmem [#allocation11], 4
    %161 = vst [vmem:[%s160] sm:$0x3] %v159
    %v162 = vld [vmem:[#allocation10] sm:$0x3]
    %s163 = sld [smem:[#allocation7 + $0x3]]
    %s164 = smul.f32 %s163, %s72
    %v165 = vstv %s164
    %v166 = vmul.f32 %v162, %v165
    %s167 = sld [smem:[#allocation9 + $0x3]]
    %s168 = smul.f32 %s167, %s72
    %v169 = vstv %s168
    %v170 = vadd.f32 %v166, %v169
    %v171 = vld [vmem:[%s82] sm:$0x3]
    %s172 = sld [smem:[#allocation7 + $0x7]]
    %s173 = smul.f32 %s172, %s72
    %v174 = vstv %s173
    %v175 = vmul.f32 %v171, %v174
    %v176 = vadd.f32 %v170, %v175
    %v177 = vld [vmem:[%s89] sm:$0x3]
    %s178 = sld [smem:[#allocation7 + $0xb]]
    %s179 = smul.f32 %s178, %s72
    %v180 = vstv %s179
    %v181 = vmul.f32 %v177, %v180
    %v182 = vadd.f32 %v176, %v181
    %v183 = vld [vmem:[%s96] sm:$0x3]
    %s184 = sld [smem:[#allocation7 + $0xf]]
    %s185 = smul.f32 %s184, %s72
    %v186 = vstv %s185
    %v187 = vmul.f32 %v183, %v186
    %v188 = vadd.f32 %v182, %v187
    %s189 = scalar_lea.vmem [#allocation11], 6
    %190 = vst [vmem:[%s189] sm:$0x3] %v188
    %s191 = sadd.s32 %s71, 1
    %s192 = sld [smem:[#allocation2 + %s191]]
    %s193 = scalar_lea.vmem [#allocation10], 8
    %v194 = vld [vmem:[%s193] sm:$0x3]
    %s195 = sld [smem:[#allocation7]]
    %s196 = smul.f32 %s195, %s192
    %v197 = vstv %s196
    %v198 = vmul.f32 %v194, %v197
    %s199 = sld [smem:[#allocation9]]
    %s200 = smul.f32 %s199, %s192
    %v201 = vstv %s200
    %v202 = vadd.f32 %v198, %v201
    %s203 = scalar_lea.vmem [#allocation10], 10
    %v204 = vld [vmem:[%s203] sm:$0x3]
    %s205 = sld [smem:[#allocation7 + $0x4]]
    %s206 = smul.f32 %s205, %s192
    %v207 = vstv %s206
    %v208 = vmul.f32 %v204, %v207
    %v209 = vadd.f32 %v202, %v208
    %s210 = scalar_lea.vmem [#allocation10], 12
    %v211 = vld [vmem:[%s210] sm:$0x3]
    %s212 = sld [smem:[#allocation7 + $0x8]]
    %s213 = smul.f32 %s212, %s192
    %v214 = vstv %s213
    %v215 = vmul.f32 %v211, %v214
    %v216 = vadd.f32 %v209, %v215
    %s217 = scalar_lea.vmem [#allocation10], 14
    %v218 = vld [vmem:[%s217] sm:$0x3]
    %s219 = sld [smem:[#allocation7 + $0xc]]
    %s220 = smul.f32 %s219, %s192
    %v221 = vstv %s220
    %v222 = vmul.f32 %v218, %v221
    %v223 = vadd.f32 %v216, %v222
    %s224 = scalar_lea.vmem [#allocation11], 8
    %225 = vst [vmem:[%s224] sm:$0x3] %v223
    %v226 = vld [vmem:[%s193] sm:$0x3]
    %s227 = sld [smem:[#allocation7 + $0x1]]
    %s228 = smul.f32 %s227, %s192
    %v229 = vstv %s228
    %v230 = vmul.f32 %v226, %v229
    %s231 = sld [smem:[#allocation9 + $0x1]]
    %s232 = smul.f32 %s231, %s192
    %v233 = vstv %s232
    %v234 = vadd.f32 %v230, %v233
    %v235 = vld [vmem:[%s203] sm:$0x3]
    %s236 = sld [smem:[#allocation7 + $0x5]]
    %s237 = smul.f32 %s236, %s192
    %v238 = vstv %s237
    %v239 = vmul.f32 %v235, %v238
    %v240 = vadd.f32 %v234, %v239
    %v241 = vld [vmem:[%s210] sm:$0x3]
    %s242 = sld [smem:[#allocation7 + $0x9]]
    %s243 = smul.f32 %s242, %s192
    %v244 = vstv %s243
    %v245 = vmul.f32 %v241, %v244
    %v246 = vadd.f32 %v240, %v245
    %v247 = vld [vmem:[%s217] sm:$0x3]
    %s248 = sld [smem:[#allocation7 + $0xd]]
    %s249 = smul.f32 %s248, %s192
    %v250 = vstv %s249
    %v251 = vmul.f32 %v247, %v250
    %v252 = vadd.f32 %v246, %v251
    %s253 = scalar_lea.vmem [#allocation11], 10
    %254 = vst [vmem:[%s253] sm:$0x3] %v252
    %v255 = vld [vmem:[%s193] sm:$0x3]
    %s256 = sld [smem:[#allocation7 + $0x2]]
    %s257 = smul.f32 %s256, %s192
    %v258 = vstv %s257
    %v259 = vmul.f32 %v255, %v258
    %s260 = sld [smem:[#allocation9 + $0x2]]
    %s261 = smul.f32 %s260, %s192
    %v262 = vstv %s261
    %v263 = vadd.f32 %v259, %v262
    %v264 = vld [vmem:[%s203] sm:$0x3]
    %s265 = sld [smem:[#allocation7 + $0x6]]
    %s266 = smul.f32 %s265, %s192
    %v267 = vstv %s266
    %v268 = vmul.f32 %v264, %v267
    %v269 = vadd.f32 %v263, %v268
    %v270 = vld [vmem:[%s210] sm:$0x3]
    %s271 = sld [smem:[#allocation7 + $0xa]]
    %s272 = smul.f32 %s271, %s192
    %v273 = vstv %s272
    %v274 = vmul.f32 %v270, %v273
    %v275 = vadd.f32 %v269, %v274
    %v276 = vld [vmem:[%s217] sm:$0x3]
    %s277 = sld [smem:[#allocation7 + $0xe]]
    %s278 = smul.f32 %s277, %s192
    %v279 = vstv %s278
    %v280 = vmul.f32 %v276, %v279
    %v281 = vadd.f32 %v275, %v280
    %s282 = scalar_lea.vmem [#allocation11], 12
    %283 = vst [vmem:[%s282] sm:$0x3] %v281
    %v284 = vld [vmem:[%s193] sm:$0x3]
    %s285 = sld [smem:[#allocation7 + $0x3]]
    %s286 = smul.f32 %s285, %s192
    %v287 = vstv %s286
    %v288 = vmul.f32 %v284, %v287
    %s289 = sld [smem:[#allocation9 + $0x3]]
    %s290 = smul.f32 %s289, %s192
    %v291 = vstv %s290
    %v292 = vadd.f32 %v288, %v291
    %v293 = vld [vmem:[%s203] sm:$0x3]
    %s294 = sld [smem:[#allocation7 + $0x7]]
    %s295 = smul.f32 %s294, %s192
    %v296 = vstv %s295
    %v297 = vmul.f32 %v293, %v296
    %v298 = vadd.f32 %v292, %v297
    %v299 = vld [vmem:[%s210] sm:$0x3]
    %s300 = sld [smem:[#allocation7 + $0xb]]
    %s301 = smul.f32 %s300, %s192
    %v302 = vstv %s301
    %v303 = vmul.f32 %v299, %v302
    %v304 = vadd.f32 %v298, %v303
    %v305 = vld [vmem:[%s217] sm:$0x3]
    %s306 = sld [smem:[#allocation7 + $0xf]]
    %s307 = smul.f32 %s306, %s192
    %v308 = vstv %s307
    %v309 = vmul.f32 %v305, %v308
    %v310 = vadd.f32 %v304, %v309
    %s311 = scalar_lea.vmem [#allocation11], 14
    %312 = vst [vmem:[%s311] sm:$0x3] %v310
    // Predicated region
    $region34: #{tpu_custom_call.1} parent=1 // pred_check
      _
    $region35: #{tpu_custom_call.1} parent=1 // pred_check_branch
      %314 = sbr.rel (0) target = $region37
    $region36: #{tpu_custom_call.1} parent=1 // pred_region
      %316 = vsyncadd [#allocation4], 0
      %s317 = sshll.u32 [#allocation11], 4
      %s318 = int_to_ptr.vmem [resolvable:$true] %s317
      %s319 = sshll.u32 %s4, 4
      %s320 = int_to_ptr.hbm [resolvable:$true] %s319
      %325 = dma.vmem_to_hbm [thread:$0]  %s318, 256, %s320, [#allocation4], 32, 32, 2
    $region37: #{tpu_custom_call.1} parent=1 // pred_fallthru
      _
    // Predicated region
    $region38: #{tpu_custom_call.1} parent=1 // pred_check
      _
    $region39: #{tpu_custom_call.1} parent=1 // pred_check_branch
      %327 = sbr.rel (0) target = $region41
    $region40: #{tpu_custom_call.1} parent=1 // pred_region
      %329 = dma.done [#allocation4], 256
    $region41: #{tpu_custom_call.1} parent=1 // pred_fallthru
      _
    %330 = vsyncpa [#allocation3], 1
    %331 = vsyncpa [#allocation4], 1
    %332 = vsyncpa [#allocation5], 1
    %333 = vsyncpa [#allocation8], 1
    %334 = vsyncpa [#allocation6], 1

</llo_original>
